<compile_context>
chip_gen: v7x
topology: tpu7x:2x2x1
jax: 0.10.0
libtpu: 0.0.40
codegen_flags: <defaults>
</compile_context>

<pallas_src>
import jax
import jax.numpy as jnp
from jax.experimental import pallas as pl
from jax.experimental.pallas import tpu as pltpu


# ----------------------------- kernel bodies ---------------------------------

_LANE = 128
_MAX_TILE_B = 128 * 1024  # 512 KiB f32 per buffer; safe on every generation.


def _forward_tile(p, x):
    """p: [H, 4] packed params, x: [1, TILE_B] lane-dense batch -> [1, TILE_B]."""
    w1 = p[:, 0:1]               # [H, 1]
    b1 = p[:, 1:2]               # [H, 1]
    w2 = p[:, 2:3]               # [H, 1]
    b2 = p[0:1, 3:4]             # [1, 1]

    # hidden = relu(x @ W1^T + b1): in_features == 1 -> broadcast multiply.
    h = jnp.maximum(w1 * x + b1, 0.0)                       # [H, TILE_B]
    # out = hidden @ W2^T + b2: out_features == 1 -> sublane reduction over H.
    y = jnp.sum(h * w2, axis=0, keepdims=True) + b2         # [1, TILE_B]
    # Exact sigmoid (approx reciprocal would exceed the 2e-5 test tolerance).
    return jax.nn.sigmoid(y)


def _wnets_fused_kernel(p_ref, x_ref, o_ref):
    # p_ref: [1, H, 4] (this grid step's language), x_ref: [1, TILE_B],
    # o_ref: [1, 1, TILE_B].
    o_ref[0] = _forward_tile(p_ref[0], x_ref[...]).astype(o_ref.dtype)


def _wnets_select_kernel(i_ref, p_ref, x_ref, o_ref):
    # i_ref: scalar-prefetch ref (already consumed by the param index_map).
    del i_ref
    o_ref[...] = _forward_tile(p_ref[0], x_ref[...]).astype(o_ref.dtype)


# ----------------------------- wrapper helpers --------------------------------


def _batch_tiling(batch):
    """Return (b_pad, tile_b, num_tiles) for a lane-dense batch slab."""
    b_pad_min = pl.cdiv(max(batch, 1), _LANE) * _LANE
    if b_pad_min <= _MAX_TILE_B:
        tile_b = b_pad_min
        b_pad = b_pad_min
    else:
        tile_b = _MAX_TILE_B
        b_pad = pl.cdiv(batch, tile_b) * tile_b
    return b_pad, tile_b, b_pad // tile_b


def _make_x_slab(x, b_pad):
    """[B, 1] float -> lane-dense [1, b_pad] slab (cheap pad, no scatter)."""
    B = x.shape[0]
    return jnp.pad(x.reshape(1, B), ((0, 0), (0, b_pad - B)))


# ----------------------------- forward: all languages -------------------------


def _wnets_forward_all_impl(packed, x):
    """sigmoid(nets[i](x)) for ALL i in one dispatch.

    packed: [n_lang, H, 4], x: [B, 1] float32  ->  [n_lang, B, 1].
    """
    n_lang, h_dim, _ = packed.shape
    B = x.shape[0]
    b_pad, tile_b, num_tiles = _batch_tiling(B)
    x_slab = _make_x_slab(x, b_pad)

    cost = pl.CostEstimate(
        flops=6 * h_dim * b_pad * n_lang,
        transcendentals=b_pad * n_lang,
        bytes_accessed=4 * b_pad + 4 * n_lang * b_pad + 16 * h_dim * n_lang,
    )

    out_slab = pl.pallas_call(
        _wnets_fused_kernel,
        out_shape=jax.ShapeDtypeStruct((n_lang, 1, b_pad), x.dtype),
        # Batch is the OUTER axis: the big x tile is fetched once per batch
        # tile (it stays resident across the inner language axis); only the
        # 512-byte param tile changes every step.
        grid=(num_tiles, n_lang),
        in_specs=[
            pl.BlockSpec((1, h_dim, 4), lambda b, g: (g, 0, 0)),
            pl.BlockSpec((1, tile_b), lambda b, g: (0, b)),
        ],
        out_specs=pl.BlockSpec((1, 1, tile_b), lambda b, g: (g, 0, b)),
        compiler_params=pltpu.CompilerParams(
            dimension_semantics=("parallel", "parallel")),
        cost_estimate=cost,
    )(packed, x_slab)

    return out_slab[:, 0, :B][..., None]                     # [n_lang, B, 1]


wnets_forward_all = jax.jit(_wnets_forward_all_impl)


# ----------------------------- forward: one language --------------------------


def _wnets_forward_impl(packed, i, x):
    """Module-equivalent forward: sigmoid(nets[i](x)), x: [B, 1] -> [B, 1]."""
    n_lang, h_dim, _ = packed.shape
    B = x.shape[0]
    b_pad, tile_b, num_tiles = _batch_tiling(B)
    x_slab = _make_x_slab(x, b_pad)

    # Guard against out-of-range language index (would otherwise be an OOB
    # block DMA from `packed`).
    i_arr = jnp.clip(jnp.asarray(i, dtype=jnp.int32), 0, n_lang - 1).reshape((1,))

    cost = pl.CostEstimate(
        flops=6 * h_dim * b_pad,
        transcendentals=b_pad,
        bytes_accessed=8 * b_pad + 16 * h_dim,
    )

    out_slab = pl.pallas_call(
        _wnets_select_kernel,
        out_shape=jax.ShapeDtypeStruct((1, b_pad), x.dtype),
        grid_spec=pltpu.PrefetchScalarGridSpec(
            num_scalar_prefetch=1,
            grid=(num_tiles,),
            in_specs=[
                # Selected net's [H, 4] row; constant index_map -> params stay
                # resident in VMEM across all batch tiles.
                pl.BlockSpec((1, h_dim, 4), lambda b, i_ref: (i_ref[0], 0, 0)),
                # Lane-dense activations, tiled over the batch.
                pl.BlockSpec((1, tile_b), lambda b, i_ref: (0, b)),
            ],
            out_specs=pl.BlockSpec((1, tile_b), lambda b, i_ref: (0, b)),
        ),
        compiler_params=pltpu.CompilerParams(
            dimension_semantics=("parallel",)),
        cost_estimate=cost,
    )(i_arr, packed, x_slab)

    return out_slab[0, :B].reshape(B, 1)


wnets_forward = jax.jit(_wnets_forward_impl)


# --------------------------- params / packing --------------------------------


def init_wnets_params(key, h_dim, n_lang):
    """Mirrors WNets.init_weights: xavier_normal_ weights, zero biases."""
    k1, k2 = jax.random.split(key)
    # Linear(1, h_dim): weight [h_dim, 1], xavier std = sqrt(2 / (1 + h_dim))
    std1 = (2.0 / (1 + h_dim)) ** 0.5
    w1 = std1 * jax.random.normal(k1, (n_lang, h_dim, 1), dtype=jnp.float32)
    # Linear(h_dim, 1): weight [1, h_dim], xavier std = sqrt(2 / (h_dim + 1))
    std2 = (2.0 / (h_dim + 1)) ** 0.5
    w2 = std2 * jax.random.normal(k2, (n_lang, 1, h_dim), dtype=jnp.float32)
    return {
        "w1": w1,                                        # [n_lang, H, 1]
        "b1": jnp.zeros((n_lang, h_dim), jnp.float32),   # [n_lang, H]
        "w2": w2,                                        # [n_lang, 1, H]
        "b2": jnp.zeros((n_lang, 1), jnp.float32),       # [n_lang, 1]
    }


def pack_wnets_params(params):
    """Pack per-net params into a single [n_lang, H, 4] array for the kernel."""
    w1 = params["w1"][:, :, 0]                                     # [n_lang, H]
    b1 = params["b1"]                                              # [n_lang, H]
    w2 = params["w2"][:, 0, :]                                     # [n_lang, H]
    n_lang, h_dim = w1.shape
    b2 = jnp.broadcast_to(params["b2"], (n_lang, h_dim))           # [n_lang, H]
    return jnp.stack([w1, b1, w2, b2], axis=-1)                    # [n_lang, H, 4]


# ----------------------------- reference -------------------------------------


def wnets_reference(params, i, x):
    """Plain-JAX reference of the PyTorch forward (for verification)."""
    w1 = params["w1"][i]     # [H, 1]
    b1 = params["b1"][i]     # [H]
    w2 = params["w2"][i]     # [1, H]
    b2 = params["b2"][i]     # [1]
    hidden = jax.nn.relu(x @ w1.T + b1)          # [B, H]
    out = hidden @ w2.T + b2                     # [B, 1]
    return jax.nn.sigmoid(out)


# ------------------------------- main -----------------------------------------


if __name__ == "__main__":
    h_dim, n_lang, batch = 32, 3, 8
    key = jax.random.PRNGKey(0)
    pkey, xkey = jax.random.split(key)

    params = init_wnets_params(pkey, h_dim, n_lang)
    packed = pack_wnets_params(params)
    x = jax.random.normal(xkey, (batch, 1), dtype=jnp.float32)

    ok = True

    # All languages in a single fused dispatch (replaces the per-i loop of
    # pallas_calls).
    y_all = wnets_forward_all(packed, x)          # [n_lang, B, 1]
    jax.block_until_ready(y_all)
    ok &= y_all.shape == (n_lang, batch, 1)
    for i in range(n_lang):
        y_ref = wnets_reference(params, i, x)
        ok &= bool(jnp.allclose(y_all[i], y_ref, atol=2e-5, rtol=1e-5))

    # Module-semantics path (single selected language), one dispatch.
    y1 = wnets_forward(packed, 1, x)              # [B, 1]
    jax.block_until_ready(y1)
    ok &= y1.shape == (batch, 1)
    ok &= bool(jnp.allclose(y1, wnets_reference(params, 1, x),
                            atol=2e-5, rtol=1e-5))

    assert ok
    print("KERNEL_OK")
</pallas_src>

<mosaic_0001>
module attributes {stable_mosaic.version = 11 : i64} {
  func.func @_wnets_fused_kernel(%arg0: i32, %arg1: i32, %arg2: memref<1x32x4xf32, #tpu.memory_space<vmem>>, %arg3: memref<1x128xf32, #tpu.memory_space<vmem>>, %arg4: memref<1x1x128xf32, #tpu.memory_space<vmem>>) attributes {dimension_semantics = [#tpu.dimension_semantics<parallel>, #tpu.dimension_semantics<parallel>], iteration_bounds = array<i64: 1, 3>, scalar_prefetch = 0 : i64, scratch_operands = 0 : i64, tpu.core_type = #tpu.core_type<tc>, window_params = [{transform_indices = @transform_0, window_bounds = array<i64: 1, 32, 4>}, {transform_indices = @transform_1, window_bounds = array<i64: 1, 128>}, {transform_indices = @transform_2, window_bounds = array<i64: 1, 1, 128>}]} {
    %c0 = arith.constant 0 : index
    %c0_0 = arith.constant 0 : index
    %c0_1 = arith.constant 0 : index
    %0 = vector.load %arg2[%c0, %c0_0, %c0_1] : memref<1x32x4xf32, #tpu.memory_space<vmem>>, vector<1x32x4xf32>
    %1 = vector.shape_cast %0 : vector<1x32x4xf32> to vector<32x4xf32>
    %c0_2 = arith.constant 0 : index
    %c0_3 = arith.constant 0 : index
    %2 = vector.load %arg3[%c0_2, %c0_3] : memref<1x128xf32, #tpu.memory_space<vmem>>, vector<1x128xf32>
    %3 = vector.extract_strided_slice %1 {offsets = [0, 0], sizes = [32, 1], strides = [1, 1]} : vector<32x4xf32> to vector<32x1xf32>
    %4 = vector.extract_strided_slice %1 {offsets = [0, 1], sizes = [32, 1], strides = [1, 1]} : vector<32x4xf32> to vector<32x1xf32>
    %5 = vector.extract_strided_slice %1 {offsets = [0, 2], sizes = [32, 1], strides = [1, 1]} : vector<32x4xf32> to vector<32x1xf32>
    %6 = vector.extract_strided_slice %1 {offsets = [0, 3], sizes = [1, 1], strides = [1, 1]} : vector<32x4xf32> to vector<1x1xf32>
    %7 = vector.broadcast %3 : vector<32x1xf32> to vector<32x128xf32>
    %8 = vector.broadcast %2 : vector<1x128xf32> to vector<32x128xf32>
    %9 = arith.mulf %7, %8 : vector<32x128xf32>
    %10 = vector.broadcast %4 : vector<32x1xf32> to vector<32x128xf32>
    %11 = arith.addf %9, %10 : vector<32x128xf32>
    %cst = arith.constant 0.000000e+00 : f32
    %12 = vector.broadcast %cst : f32 to vector<32x128xf32>
    %13 = arith.maximumf %11, %12 : vector<32x128xf32>
    %14 = vector.broadcast %5 : vector<32x1xf32> to vector<32x128xf32>
    %15 = arith.mulf %13, %14 : vector<32x128xf32>
    %cst_4 = arith.constant dense<0.000000e+00> : vector<128xf32>
    %16 = vector.multi_reduction <add>, %15, %cst_4 [0] : vector<32x128xf32> to vector<128xf32>
    %17 = vector.shape_cast %16 : vector<128xf32> to vector<1x128xf32>
    %18 = vector.broadcast %6 : vector<1x1xf32> to vector<1x128xf32>
    %19 = arith.addf %17, %18 : vector<1x128xf32>
    %20 = arith.negf %19 : vector<1x128xf32>
    %21 = math.exp %20 : vector<1x128xf32>
    %cst_5 = arith.constant 1.000000e+00 : f32
    %22 = vector.broadcast %cst_5 : f32 to vector<1x128xf32>
    %23 = arith.addf %22, %21 : vector<1x128xf32>
    %24 = arith.divf %22, %23 : vector<1x128xf32>
    %c0_6 = arith.constant 0 : index
    %c0_7 = arith.constant 0 : index
    %c0_8 = arith.constant 0 : index
    %25 = vector.load %arg4[%c0_6, %c0_7, %c0_8] : memref<1x1x128xf32, #tpu.memory_space<vmem>>, vector<1x1x128xf32>
    %26 = vector.shape_cast %25 : vector<1x1x128xf32> to vector<1x128xf32>
    %27 = vector.shape_cast %24 : vector<1x128xf32> to vector<1x1x128xf32>
    tpu.vector_store %arg4[%c0_6, %c0_7, %c0_8], %27 {strides = array<i32>} : memref<1x1x128xf32, #tpu.memory_space<vmem>>, vector<1x1x128xf32>,
    return
  }
  func.func @transform_0(%arg0: i32, %arg1: i32) -> (i32, i32, i32) {
    %c0_i32 = arith.constant 0 : i32
    %c0_i32_0 = arith.constant 0 : i32
    %c0_i32_1 = arith.constant 0 : i32
    return %arg1, %c0_i32, %c0_i32_0 : i32, i32, i32
  }
  func.func @transform_1(%arg0: i32, %arg1: i32) -> (i32, i32) {
    %c0_i32 = arith.constant 0 : i32
    %c0_i32_0 = arith.constant 0 : i32
    return %c0_i32, %arg0 : i32, i32
  }
  func.func @transform_2(%arg0: i32, %arg1: i32) -> (i32, i32, i32) {
    %c0_i32 = arith.constant 0 : i32
    %c0_i32_0 = arith.constant 0 : i32
    return %arg1, %c0_i32, %arg0 : i32, i32, i32
  }
}

</mosaic_0001>

<llo_original>
// kernel: _wnets_forward_all_impl.1
$region0: #{_wnets_forward_all_impl.1}
  #allocation0 [shape = 'u32[]', space=smem, size = 0x4, offset = 0x4, fixed_abs, tag = 'smem constant byte address 0x4 - core index']
  #allocation1 [shape = 'u32[144,128]{1,0:T(1,128)}', space=vmem, size = 0x12000, scoped, tag = 'internal scratch']
  %s0 = inlined_call_operand.vmem [shape: f32[3,32,4], index: 0, kind: input, shape index: {}]
  %s1 = inlined_call_operand.vmem [shape: f32[1,128], index: 1, kind: input, shape index: {}]
  %s2 = inlined_call_operand.vmem [shape: f32[3,1,128], index: 2, kind: output, shape index: {}]
  %s3 = sld [smem:[#allocation0]]
  $region41: #{_wnets_forward_all_impl.1} parent=0
    _
  %s5 = ssub.s32 1, %s3
  %s6 = scalar_select 0, %s5, %s3
  loop: start=0, step=1, limit=5
  $region2: #{_wnets_forward_all_impl.1} parent=0 // loop_pre_header
    _
  $region3: #{_wnets_forward_all_impl.1} parent=0 // loop_header
    %s8 = sphi 0, %s12
    %p9 = scmp.ge.s32.totalorder %s8, 5
    %s15 = sphi 0, %s27
    %s16 = sphi 0, %s23
    %s17 = sphi 0, %s15
    %s18 = sphi 0, %s16
    %s19 = sphi 0, %s17
    %s20 = sphi 0, %s18
    %s30 = sphi 0, %s32
    %s33 = sphi 0, %s30
    %s34 = sphi 0, %s33
    %s50 = sphi 0, %s34
    %s56 = sphi 0, %s58
    %s59 = sphi 0, %s56
    %s60 = sphi 0, %s59
    %s76 = sphi 0, %s60
    %s84 = sphi 0, %s86
    %s87 = sphi 0, %s84
    %s88 = sphi 0, %s87
    %s104 = sphi 0, %s88
  $region4: #{_wnets_forward_all_impl.1} parent=0 // loop_header_branch
    %11 = sbr.rel (%p9) target = $region8
  $region5: #{_wnets_forward_all_impl.1} parent=0 // loop_body
    %s13 = ssub.s32 %s8, 1
    %s14 = ssub.s32 %s8, 2
    %s21 = sadd.s32 1, %s16
    %p22 = scmp.ge.s32.totalorder %s21, 3
    %s23 = scalar_select %p22, 0, %s21
    %s24 = sadd.s32 1, %s15
    %s25 = scalar_select %p22, %s24, %s15
    %p26 = scmp.ge.s32.totalorder %s25, 1
    %s27 = scalar_select %p26, 0, %s25
    %s28 = ssub.s32 %s16, %s23
    %p29 = scmp.eq.s32.totalorder %s28, 0
    %s31 = sadd.s32 %s30, 1
    %s32 = scalar_select %p29, %s30, %s31
    %p35 = pneg %p29
    %p36 = scmp.eq.s32.totalorder %s8, 2
    %p37 = por %p35, %p36
    %p38 = scmp.ne.s32.totalorder %s30, %s33
    %p39 = scmp.eq.s32.totalorder %s8, 0
    %p40 = por %p38, %p39
    %p41 = scmp.ne.s32.totalorder %s30, %s33
    %p42 = scmp.eq.s32.totalorder %s13, 2
    %p43 = por %p41, %p42
    %p44 = scmp.ne.s32.totalorder %s33, %s34
    %p45 = scmp.eq.s32.totalorder %s13, 0
    %p46 = por %p44, %p45
    %p47 = scmp.ne.s32.totalorder %s33, %s34
    %p48 = scmp.eq.s32.totalorder %s14, 2
    %p49 = por %p47, %p48
    %p51 = scmp.ne.s32.totalorder %s34, %s50
    %p52 = scmp.eq.s32.totalorder %s14, 0
    %p53 = por %p51, %p52
    %s54 = ssub.s32 %s15, %s27
    %p55 = scmp.eq.s32.totalorder %s54, 0
    %s57 = sadd.s32 %s56, 1
    %s58 = scalar_select %p55, %s56, %s57
    %p61 = pneg %p55
    %p62 = scmp.eq.s32.totalorder %s8, 2
    %p63 = por %p61, %p62
    %p64 = scmp.ne.s32.totalorder %s56, %s59
    %p65 = scmp.eq.s32.totalorder %s8, 0
    %p66 = por %p64, %p65
    %p67 = scmp.ne.s32.totalorder %s56, %s59
    %p68 = scmp.eq.s32.totalorder %s13, 2
    %p69 = por %p67, %p68
    %p70 = scmp.ne.s32.totalorder %s59, %s60
    %p71 = scmp.eq.s32.totalorder %s13, 0
    %p72 = por %p70, %p71
    %p73 = scmp.ne.s32.totalorder %s59, %s60
    %p74 = scmp.eq.s32.totalorder %s14, 2
    %p75 = por %p73, %p74
    %p77 = scmp.ne.s32.totalorder %s60, %s76
    %p78 = scmp.eq.s32.totalorder %s14, 0
    %p79 = por %p77, %p78
    %s80 = ssub.s32 %s16, %s23
    %s81 = ssub.s32 %s15, %s27
    %s82 = sor.u32 %s80, %s81
    %p83 = scmp.eq.s32.totalorder %s82, 0
    %s85 = sadd.s32 %s84, 1
    %s86 = scalar_select %p83, %s84, %s85
    %p89 = pneg %p83
    %p90 = scmp.eq.s32.totalorder %s8, 2
    %p91 = por %p89, %p90
    %p92 = scmp.ne.s32.totalorder %s84, %s87
    %p93 = scmp.eq.s32.totalorder %s8, 0
    %p94 = por %p92, %p93
    %p95 = scmp.ne.s32.totalorder %s84, %s87
    %p96 = scmp.eq.s32.totalorder %s13, 2
    %p97 = por %p95, %p96
    %p98 = scmp.ne.s32.totalorder %s87, %s88
    %p99 = scmp.eq.s32.totalorder %s13, 0
    %p100 = por %p98, %p99
    %p101 = scmp.ne.s32.totalorder %s87, %s88
    %p102 = scmp.eq.s32.totalorder %s14, 2
    %p103 = por %p101, %p102
    %p105 = scmp.ne.s32.totalorder %s88, %s104
    %p106 = scmp.eq.s32.totalorder %s14, 0
    %p107 = por %p105, %p106
    %p108 = scmp.le.s32.totalorder 1, %s8
    %p109 = scmp.lt.s32.totalorder %s8, 4
    %p110 = pnand %p108, %p109
    %p111 = pneg %p110
    // Predicated region
    $region9: #{_wnets_forward_all_impl.1} parent=5 // pred_check
      _
    $region10: #{_wnets_forward_all_impl.1} parent=5 // pred_check_branch
      %113 = sbr.rel (%p110) target = $region12
    $region11: #{_wnets_forward_all_impl.1} parent=5 // pred_region
      %s114 = ssub.s32 %s8, 1
      // Predicated region
      $region13: #{_wnets_forward_all_impl.1} parent=11 // pred_check
        %p115 = pneg %p72
      $region14: #{_wnets_forward_all_impl.1} parent=11 // pred_check_branch
        %117 = sbr.rel (%p115) target = $region16
      $region15: #{_wnets_forward_all_impl.1} parent=11 // pred_region
        %p118 = scmp.lt.s32.totalorder %s17, 0
        %s119 = scalar_select %p118, %s17, 0
        %s120 = scalar_lea.vmem %s1, %s119
      $region16: #{_wnets_forward_all_impl.1} parent=11 // pred_fallthru
        _
    $region12: #{_wnets_forward_all_impl.1} parent=5 // pred_fallthru
      _
    %p121 = scmp.lt.s32.totalorder %s8, 3
    // Predicated region
    $region17: #{_wnets_forward_all_impl.1} parent=5 // pred_check
      %p122 = pneg %p121
    $region18: #{_wnets_forward_all_impl.1} parent=5 // pred_check_branch
      %124 = sbr.rel (%p122) target = $region20
    $region19: #{_wnets_forward_all_impl.1} parent=5 // pred_region
      // Predicated region
      $region21: #{_wnets_forward_all_impl.1} parent=19 // pred_check
        %p125 = pneg %p40
      $region22: #{_wnets_forward_all_impl.1} parent=19 // pred_check_branch
        %127 = sbr.rel (%p125) target = $region24
      $region23: #{_wnets_forward_all_impl.1} parent=19 // pred_region
        %p128 = scmp.lt.s32.totalorder %s16, 2
        %s129 = scalar_select %p128, %s16, 2
        %s130 = smul.addr %s129, 4
        %s131 = smul.addr %s130, 8
        %s132 = scalar_lea.vmem %s0, %s131
      $region24: #{_wnets_forward_all_impl.1} parent=19 // pred_fallthru
        _
    $region20: #{_wnets_forward_all_impl.1} parent=5 // pred_fallthru
      _
    %p133 = scmp.le.s32.totalorder 1, %s8
    %p134 = scmp.lt.s32.totalorder %s8, 4
    %p135 = pnand %p133, %p134
    %p136 = pneg %p135
    // Predicated region
    $region25: #{_wnets_forward_all_impl.1} parent=5 // pred_check
      _
    $region26: #{_wnets_forward_all_impl.1} parent=5 // pred_check_branch
      %138 = sbr.rel (%p135) target = $region28
    $region27: #{_wnets_forward_all_impl.1} parent=5 // pred_region
      %s139 = ssub.s32 %s8, 1
      %p140 = scmp.lt.s32.totalorder %s18, 2
      %s141 = scalar_select %p140, %s18, 2
      %s142 = smul.addr %s141, 4
      %s143 = smul.addr %s142, 8
      %s144 = scalar_lea.vmem %s0, %s143
      %p145 = pneg %p46
      %p146 = pneg %p43
      %p147 = scmp.lt.s32.totalorder %s17, 0
      %s148 = scalar_select %p147, %s17, 0
      %s149 = scalar_lea.vmem %s1, %s148
      %p150 = pneg %p72
      %p151 = pneg %p69
      %p152 = pneg %p100
      %p153 = pneg %p97
      %p154 = scmp.lt.s32.totalorder %s18, 2
      %s155 = scalar_select %p154, %s18, 2
      %p156 = scmp.lt.s32.totalorder %s17, 0
      %s157 = scalar_select %p156, %s17, 0
      %s158 = sadd.s32 %s157, %s155
      %s159 = scalar_lea.vmem %s2, %s158
      %p160 = scmp.lt.s32.totalorder %s18, 2
      %s161 = scalar_select %p160, %s18, 2
      %s162 = smul.addr %s161, 4
      %s163 = smul.addr %s162, 8
      %s164 = scalar_lea.vmem %s0, %s163
      %p165 = scmp.lt.s32.totalorder %s17, 0
      %s166 = scalar_select %p165, %s17, 0
      %s167 = scalar_lea.vmem %s1, %s166
      %p168 = scmp.lt.s32.totalorder %s18, 2
      %s169 = scalar_select %p168, %s18, 2
      %p170 = scmp.lt.s32.totalorder %s17, 0
      %s171 = scalar_select %p170, %s17, 0
      %s172 = sadd.s32 %s171, %s169
      %s173 = scalar_lea.vmem %s2, %s172
      %v174 = vld [vmem:[%s164] sm:$0xff]
      %v175 = vld [vmem:[%s164 + $0x8] sm:$0xff]
      %v176 = vld [vmem:[%s164 + $0x10] sm:$0xff]
      %v177 = vld [vmem:[%s164 + $0x18] sm:$0xff]
      %v178 = vld [vmem:[%s167] sm:$0x1]
      %180 = vset.pattern.permute.xlu0 0
      %181 = vperm.xlu0 %180, %v174
      %v182 = vpop.permute.xlu0 %181
      %185 = vset.pattern.permute.xlu0 0
      %186 = vperm.xlu0 %185, %v175
      %v187 = vpop.permute.xlu0 %186
      %190 = vset.pattern.permute.xlu0 0
      %191 = vperm.xlu0 %190, %v176
      %v192 = vpop.permute.xlu0 %191
      %195 = vset.pattern.permute.xlu0 0
      %196 = vperm.xlu0 %195, %v177
      %v197 = vpop.permute.xlu0 %196
      %v200 = vlaneseq
      %v201 = vshrl.u32 %v200, 7
      %v202 = vsub.s32 0, %v201
      %v203 = vrot.slane %v178, %v202
      %v205 = vmul.f32 %v182, %v203
      %v206 = vmul.f32 %v187, %v203
      %v207 = vmul.f32 %v192, %v203
      %v208 = vmul.f32 %v197, %v203
      %209 = vset.pattern.permute.xlu0 1
      %210 = vperm.xlu0 %209, %v174
      %v211 = vpop.permute.xlu0 %210
      %213 = vset.pattern.permute.xlu0 1
      %214 = vperm.xlu0 %213, %v175
      %v215 = vpop.permute.xlu0 %214
      %217 = vset.pattern.permute.xlu0 1
      %218 = vperm.xlu0 %217, %v176
      %v219 = vpop.permute.xlu0 %218
      %221 = vset.pattern.permute.xlu0 1
      %222 = vperm.xlu0 %221, %v177
      %v223 = vpop.permute.xlu0 %222
      %v225 = vadd.f32 %v205, %v211
      %v226 = vadd.f32 %v206, %v215
      %v227 = vadd.f32 %v207, %v219
      %v228 = vadd.f32 %v208, %v223
      %v229 = vmax.f32 %v225, 0.0
      %v230 = vmax.f32 %v226, 0.0
      %v231 = vmax.f32 %v227, 0.0
      %v232 = vmax.f32 %v228, 0.0
      %233 = vset.pattern.permute.xlu0 2
      %234 = vperm.xlu0 %233, %v174
      %v235 = vpop.permute.xlu0 %234
      %237 = vset.pattern.permute.xlu0 2
      %238 = vperm.xlu0 %237, %v175
      %v239 = vpop.permute.xlu0 %238
      %241 = vset.pattern.permute.xlu0 2
      %242 = vperm.xlu0 %241, %v176
      %v243 = vpop.permute.xlu0 %242
      %245 = vset.pattern.permute.xlu0 2
      %246 = vperm.xlu0 %245, %v177
      %v247 = vpop.permute.xlu0 %246
      %v249 = vmul.f32 %v229, %v235
      %v250 = vmul.f32 %v230, %v239
      %v251 = vmul.f32 %v231, %v243
      %v252 = vmul.f32 %v232, %v247
      %v253 = vadd.f32 %v249, %v250
      %v254 = vadd.f32 %v253, %v251
      %v255 = vadd.f32 %v254, %v252
      %v256 = vrot.slane %v255, 4
      %v257 = vadd.f32 %v255, %v256
      %v258 = vrot.slane %v257, 2
      %v259 = vadd.f32 %v257, %v258
      %v260 = vrot.slane %v259, 1
      %v261 = vadd.f32 %v259, %v260
      %262 = vset.pattern.permute.xlu0 3
      %263 = vperm.xlu0 %262, %v174
      %v264 = vpop.permute.xlu0 %263
      %v266 = vadd.f32 %v261, %v264
      %v267 = vxor.u32 %v266, 2147483648
      %v268 = vmul.f32 %v267, 1.442695
      %v269 = vpow.pop %v268
      %v270 = vadd.f32 %v269, 1.0
      %v271 = vrcp.pop %v270
      %v272 = vmul.f32 1.0, %v271
      %273 = vst [vmem:[%s173] sm:$0x1] %v272
      %p274 = scmp.lt.s32.totalorder %s18, 2
      %s275 = scalar_select %p274, %s18, 2
      %p276 = scmp.lt.s32.totalorder %s17, 0
      %s277 = scalar_select %p276, %s17, 0
      %s278 = sadd.s32 %s277, %s275
      %s279 = scalar_lea.vmem %s2, %s278
      // Predicated region
      $region29: #{_wnets_forward_all_impl.1} parent=27 // pred_check
        %p280 = pneg %p97
      $region30: #{_wnets_forward_all_impl.1} parent=27 // pred_check_branch
        %282 = sbr.rel (%p280) target = $region32
      $region31: #{_wnets_forward_all_impl.1} parent=27 // pred_region
        _
      $region32: #{_wnets_forward_all_impl.1} parent=27 // pred_fallthru
        _
    $region28: #{_wnets_forward_all_impl.1} parent=5 // pred_fallthru
      _
    %p283 = scmp.le.s32.totalorder 2, %s8
    // Predicated region
    $region33: #{_wnets_forward_all_impl.1} parent=5 // pred_check
      %p284 = pneg %p283
    $region34: #{_wnets_forward_all_impl.1} parent=5 // pred_check_branch
      %286 = sbr.rel (%p284) target = $region36
    $region35: #{_wnets_forward_all_impl.1} parent=5 // pred_region
      %s287 = ssub.s32 %s8, 2
      // Predicated region
      $region37: #{_wnets_forward_all_impl.1} parent=35 // pred_check
        %p288 = pneg %p103
      $region38: #{_wnets_forward_all_impl.1} parent=35 // pred_check_branch
        %290 = sbr.rel (%p288) target = $region40
      $region39: #{_wnets_forward_all_impl.1} parent=35 // pred_region
        %p291 = scmp.lt.s32.totalorder %s20, 2
        %s292 = scalar_select %p291, %s20, 2
        %p293 = scmp.lt.s32.totalorder %s19, 0
        %s294 = scalar_select %p293, %s19, 0
        %s295 = sadd.s32 %s294, %s292
        %s296 = scalar_lea.vmem %s2, %s295
      $region40: #{_wnets_forward_all_impl.1} parent=35 // pred_fallthru
        _
    $region36: #{_wnets_forward_all_impl.1} parent=5 // pred_fallthru
      _
  $region6: #{_wnets_forward_all_impl.1} parent=0 // loop_footer
    %s12 = sadd.s32 1, %s8
  $region7: #{_wnets_forward_all_impl.1} parent=0 // loop_footer_branch
    %7 = sbr.rel target = $region3
  $region8: #{_wnets_forward_all_impl.1} parent=0 // loop_exit
    _

</llo_original>
